<compile_context>
chip_gen: v7x
topology: tpu7x:2x2x1
jax: 0.10.0
libtpu: 0.0.40
codegen_flags: <defaults>
</compile_context>

<pallas_src>
import jax
import jax.numpy as jnp
from jax.experimental import pallas as pl
from jax.experimental.pallas import tpu as pltpu

_LANE = 128


def _dropconnect_kernel(scale_ref, x_ref, o_ref):
    # scale_ref: (BN, 1) f32 per-sample scale (0.0 or 1/keep), broadcast over lanes.
    # x_ref / o_ref: (BN, TL) block of the flattened (N, L) input/output.
    s = scale_ref[...]                            # f32
    x = x_ref[...].astype(jnp.float32)            # mem-bound: f32 math is free
    o_ref[...] = (x * s).astype(o_ref.dtype)


def _per_buffer_budget():
    """Per-buffer VMEM budget (bytes) and optional explicit vmem limit, per chip gen."""
    budget = 3 * 1024 * 1024          # 4 buffers = 12 MiB < v5e's 16 MiB scoped default
    vmem_limit = None
    kind = ""
    try:
        kind = jax.devices()[0].device_kind.lower()
    except Exception:
        pass
    vmem_cap = 128 * 1024 * 1024
    try:
        vmem_cap = int(pltpu.get_tpu_info().vmem_capacity_bytes)
    except Exception:
        pass
    if vmem_cap <= 64 * 1024 * 1024 or "v7" in kind:
        # v7x-class: only 64 MiB VMEM but ~3.2 TB/s HBM -> larger tiles, explicit limit.
        budget = 6 * 1024 * 1024
        vmem_limit = 40 * 1024 * 1024
    elif "v6" in kind:
        budget = 4 * 1024 * 1024      # 4 x 4 MiB fits v6e's 32 MiB scoped default
    return budget, vmem_limit


def _choose_tiles(N, L, itemsize, budget_bytes):
    """Pick a (BN, TL) block: lane-dense, packed-sublane-aligned, ~budget bytes."""
    sub = 8 * max(1, 4 // itemsize)               # 8 f32, 16 bf16, 32 int8/fp8
    budget_elems = max(_LANE * sub, budget_bytes // itemsize)

    if N * L <= budget_elems:                     # whole array fits in one block
        return N, L

    row_group = min(N, sub)
    if row_group * L <= budget_elems:
        # Full feature rows; tile only the batch (sublane) dimension.
        bn = (budget_elems // L // sub) * sub
        bn = max(sub, min(bn, N))
        return bn, L

    # A minimal row group is already wider than the budget: tile the feature dim too.
    bn = N if N < sub else sub
    tl = (budget_elems // bn // _LANE) * _LANE
    tl = max(_LANE, tl)
    if tl >= L:
        tl = L
    return bn, tl


def drop_connect(x, ratio, key, training=True):
    """DropConnect forward.

    Args:
      x:     (N, C, d1, ..., dn) array (matches the PyTorch module).
      ratio: drop probability (same meaning as the PyTorch module's `ratio`).
      key:   jax PRNG key used to draw the per-batch Bernoulli mask.
      training: if False, identity (matches `self.training == False`).
    """
    keep = 1.0 - abs(float(ratio))
    if not training or keep >= 1.0:               # eval mode or ratio == 0 -> identity
        return x
    assert 0.0 < keep < 1.0, "drop ratio must be in (0, 1)"

    orig_shape = x.shape
    N = orig_shape[0]
    L = 1
    for d in orig_shape[1:]:
        L *= d

    # Per-batch Bernoulli(keep) mask, exactly as: floor(keep + U[0,1)).
    u = jax.random.uniform(key, (N,), dtype=jnp.float32)
    mask = jnp.floor(keep + u)
    scale = (mask / keep).astype(jnp.float32).reshape(N, 1)   # 0.0 or 1/keep

    itemsize = jnp.dtype(x.dtype).itemsize
    budget_bytes, vmem_limit = _per_buffer_budget()
    BN, TL = _choose_tiles(N, L, itemsize, budget_bytes)
    grid = (pl.cdiv(N, BN), pl.cdiv(L, TL))

    x2 = x.reshape(N, L)                          # contiguous flatten: no HBM pass

    # TODO(synk): at high drop ratios, a manual-DMA variant (memory_space=pl.ANY +
    # make_async_copy gated by pl.when(scale != 0)) could skip input reads for
    # dropped samples; not worth the complexity at typical ratios (~0.2).
    out2 = pl.pallas_call(
        _dropconnect_kernel,
        out_shape=jax.ShapeDtypeStruct((N, L), x.dtype),
        grid=grid,
        in_specs=[
            pl.BlockSpec((BN, 1), lambda i, j: (i, 0)),    # per-sample scale (f32)
            pl.BlockSpec((BN, TL), lambda i, j: (i, j)),   # x tile
        ],
        out_specs=pl.BlockSpec((BN, TL), lambda i, j: (i, j)),
        compiler_params=pltpu.CompilerParams(
            dimension_semantics=("parallel", "parallel"),
            vmem_limit_bytes=vmem_limit,
        ),
        cost_estimate=pl.CostEstimate(
            flops=N * L,
            transcendentals=0,
            bytes_accessed=2 * N * L * itemsize + N * 4,
        ),
    )(scale, x2)

    return out2.reshape(orig_shape)


def _reference(x, ratio, key):
    keep = 1.0 - abs(float(ratio))
    n = x.shape[0]
    u = jax.random.uniform(key, (n,), dtype=jnp.float32)
    mask = jnp.floor(keep + u).reshape((n,) + (1,) * (x.ndim - 1))
    return (x.astype(jnp.float32) / keep * mask).astype(x.dtype)


if __name__ == "__main__":
    key = jax.random.PRNGKey(0)
    k_x, k_mask, k_x2, k_mask2 = jax.random.split(key, 4)

    # Case 1: f32, shape from the module's intended use (N, C, H, W).
    N, C, H, W = 2, 4, 16, 16
    x = jax.random.normal(k_x, (N, C, H, W), dtype=jnp.float32)
    ratio = 0.2
    out = jax.block_until_ready(drop_connect(x, ratio, k_mask, training=True))
    ref = _reference(x, ratio, k_mask)
    assert jnp.allclose(out, ref, atol=1e-6, rtol=1e-6), "f32 mismatch vs reference"

    # Case 2: bf16, non-128-multiple feature size, larger batch (exercises the
    # unpadded boundary handling and the f32-multiply/downcast path).
    x_b = jax.random.normal(k_x2, (10, 3, 9, 5), dtype=jnp.bfloat16)
    out_b = jax.block_until_ready(drop_connect(x_b, 0.5, k_mask2, training=True))
    ref_b = _reference(x_b, 0.5, k_mask2)
    assert jnp.allclose(out_b.astype(jnp.float32), ref_b.astype(jnp.float32),
                        atol=2e-2, rtol=2e-2), "bf16 mismatch vs reference"

    # Eval mode is identity; ratio == 0 is identity.
    assert jnp.array_equal(drop_connect(x, ratio, k_mask, training=False), x)
    assert jnp.array_equal(drop_connect(x, 0.0, k_mask, training=True), x)

    print("KERNEL_OK")
</pallas_src>

<mosaic_0001>
module attributes {stable_mosaic.version = 11 : i64} {
  func.func @_dropconnect_kernel(%arg0: i32, %arg1: i32, %arg2: memref<2x1xf32, #tpu.memory_space<vmem>>, %arg3: memref<2x1024xf32, #tpu.memory_space<vmem>>, %arg4: memref<2x1024xf32, #tpu.memory_space<vmem>>) attributes {dimension_semantics = [#tpu.dimension_semantics<parallel>, #tpu.dimension_semantics<parallel>], iteration_bounds = array<i64: 1, 1>, scalar_prefetch = 0 : i64, scratch_operands = 0 : i64, tpu.core_type = #tpu.core_type<tc>, window_params = [{transform_indices = @transform_0, window_bounds = array<i64: 2, 1>}, {transform_indices = @transform_1, window_bounds = array<i64: 2, 1024>}, {transform_indices = @transform_2, window_bounds = array<i64: 2, 1024>}]} {
    %c0 = arith.constant 0 : index
    %c0_0 = arith.constant 0 : index
    %0 = vector.load %arg2[%c0, %c0_0] : memref<2x1xf32, #tpu.memory_space<vmem>>, vector<2x1xf32>
    %c0_1 = arith.constant 0 : index
    %c0_2 = arith.constant 0 : index
    %1 = vector.load %arg3[%c0_1, %c0_2] : memref<2x1024xf32, #tpu.memory_space<vmem>>, vector<2x1024xf32>
    %2 = vector.broadcast %0 : vector<2x1xf32> to vector<2x1024xf32>
    %3 = arith.mulf %1, %2 : vector<2x1024xf32>
    %c0_3 = arith.constant 0 : index
    %c0_4 = arith.constant 0 : index
    %4 = vector.load %arg4[%c0_3, %c0_4] : memref<2x1024xf32, #tpu.memory_space<vmem>>, vector<2x1024xf32>
    tpu.vector_store %arg4[%c0_3, %c0_4], %3 {strides = array<i32>} : memref<2x1024xf32, #tpu.memory_space<vmem>>, vector<2x1024xf32>,
    return
  }
  func.func @transform_0(%arg0: i32, %arg1: i32) -> (i32, i32) {
    %c0_i32 = arith.constant 0 : i32
    %c0_i32_0 = arith.constant 0 : i32
    return %arg0, %c0_i32 : i32, i32
  }
  func.func @transform_1(%arg0: i32, %arg1: i32) -> (i32, i32) {
    %c0_i32 = arith.constant 0 : i32
    return %arg0, %arg1 : i32, i32
  }
  func.func @transform_2(%arg0: i32, %arg1: i32) -> (i32, i32) {
    %c0_i32 = arith.constant 0 : i32
    return %arg0, %arg1 : i32, i32
  }
}

</mosaic_0001>

<llo_original>
// kernel: tpu_custom_call.1
$region0: #{tpu_custom_call.1}
  #allocation0 [shape = 'u32[]', space=smem, size = 0x4, offset = 0x4, fixed_abs, tag = 'smem constant byte address 0x4 - core index']
  #allocation1 [shape = 'u32[144,128]{1,0:T(1,128)}', space=vmem, size = 0x12000, scoped, tag = 'internal scratch']
  %s0 = inlined_call_operand.vmem [shape: f32[2,1], index: 0, kind: input, shape index: {}]
  %s1 = inlined_call_operand.hbm [shape: f32[2,1024], index: 1, kind: input, shape index: {}]
  %s2 = inlined_call_operand.hbm [shape: f32[2,1024], index: 2, kind: output, shape index: {}]
  %s3 = sld [smem:[#allocation0]]
  $region22: #{tpu_custom_call.1} parent=0
    _
  %s5 = ssub.s32 1, %s3
  %s6 = scalar_select 0, %s5, %s3
  $region1: #{tpu_custom_call.1} parent=0
    #allocation2 [shape = 'u8[8192]{0}', space=vmem, size = 0x2000, scoped, tag = 'input window, operand 1, single buffered']
    #allocation3 [shape = 's32[1]{0}', space=sflag, size = 0x4, scoped, tag = 'scoped memory for tpu_custom_call.1']
    #allocation4 [shape = 's32[1]{0}', space=sflag, size = 0x4, scoped, tag = 'scoped memory for tpu_custom_call.1']
    #allocation5 [shape = 'u8[8192]{0}', space=vmem, size = 0x2000, scoped, tag = 'output window, operand 0, single buffered']
    %7 = vsyncpa [#allocation3], 0
    %8 = vsyncpa [#allocation4], 0
    // Predicated region
    $region2: #{tpu_custom_call.1} parent=1 // pred_check
      _
    $region3: #{tpu_custom_call.1} parent=1 // pred_check_branch
      %10 = sbr.rel (0) target = $region5
    $region4: #{tpu_custom_call.1} parent=1 // pred_region
      _
    $region5: #{tpu_custom_call.1} parent=1 // pred_fallthru
      _
    // Predicated region
    $region6: #{tpu_custom_call.1} parent=1 // pred_check
      _
    $region7: #{tpu_custom_call.1} parent=1 // pred_check_branch
      %12 = sbr.rel (0) target = $region9
    $region8: #{tpu_custom_call.1} parent=1 // pred_region
      %s14 = ssub.s32 256, 256
      %15 = vsyncadd [#allocation3], %s14
      %s17 = sshll.u32 [#allocation2], 4
      %s18 = int_to_ptr.vmem [resolvable:$true] %s17
      %20 = dma.hbm_to_vmem [thread:$0]  %s1, 256, %s18, [#allocation3]
    $region9: #{tpu_custom_call.1} parent=1 // pred_fallthru
      _
    // Predicated region
    $region10: #{tpu_custom_call.1} parent=1 // pred_check
      _
    $region11: #{tpu_custom_call.1} parent=1 // pred_check_branch
      %22 = sbr.rel (0) target = $region13
    $region12: #{tpu_custom_call.1} parent=1 // pred_region
      %23 = dma.done [#allocation3], 256
    $region13: #{tpu_custom_call.1} parent=1 // pred_fallthru
      _
    %v24 = vld [vmem:[%s0] sm:$0x3]
    %v25 = vld [vmem:[#allocation2] sm:$0xff]
    %v26 = vld [vmem:[#allocation2 + $0x8] sm:$0xff]
    %28 = vset.pattern.permute.xlu0 0
    %29 = vperm.xlu0 %28, %v24
    %v30 = vpop.permute.xlu0 %29
    %v32 = vunpack.c.l.s4 269488144
    %v33 = vunpack.c.0.s8 %v32
    %v34 = vlaneseq
    %v35 = vshrl.u32 %v34, 7
    %v36 = vsub.s32 %v33, %v35
    %v37 = vrot.slane %v30, %v36
    %v39 = vmul.f32 %v25, %v37
    %v40 = vmul.f32 %v26, %v37
    %41 = vst [vmem:[#allocation5] sm:$0xff] %v39
    %42 = vst [vmem:[#allocation5 + $0x8] sm:$0xff] %v40
    // Predicated region
    $region14: #{tpu_custom_call.1} parent=1 // pred_check
      _
    $region15: #{tpu_custom_call.1} parent=1 // pred_check_branch
      %44 = sbr.rel (0) target = $region17
    $region16: #{tpu_custom_call.1} parent=1 // pred_region
      %s46 = ssub.s32 256, 256
      %47 = vsyncadd [#allocation4], %s46
      %s49 = sshll.u32 [#allocation5], 4
      %s50 = int_to_ptr.vmem [resolvable:$true] %s49
      %52 = dma.vmem_to_hbm [thread:$0]  %s50, 256, %s2, [#allocation4]
    $region17: #{tpu_custom_call.1} parent=1 // pred_fallthru
      _
    // Predicated region
    $region18: #{tpu_custom_call.1} parent=1 // pred_check
      _
    $region19: #{tpu_custom_call.1} parent=1 // pred_check_branch
      %54 = sbr.rel (0) target = $region21
    $region20: #{tpu_custom_call.1} parent=1 // pred_region
      %55 = dma.done [#allocation4], 256
    $region21: #{tpu_custom_call.1} parent=1 // pred_fallthru
      _
    %56 = vsyncpa [#allocation3], 1
    %57 = vsyncpa [#allocation4], 1

</llo_original>
